<compile_context>
chip_gen: v7x
topology: tpu7x:2x2x1
jax: 0.10.0
libtpu: 0.0.40
codegen_flags: <defaults>
</compile_context>

<pallas_src>
import functools

import jax
import jax.numpy as jnp
from jax.experimental import pallas as pl
from jax.experimental.pallas import tpu as pltpu


def find_multiple(n: int, k: int) -> int:
    if n % k == 0:
        return n
    return n + k - (n % k)


def _round_up(n: int, k: int) -> int:
    return -(-n // k) * k


# ---------------------------------------------------------------------------
# Kernel body
# ---------------------------------------------------------------------------
def _mlp_kernel(x_ref, w1_ref, w2_ref, wp_ref, b_ref, o_ref, acc_ref, *,
                compute_dtype):
    """Fused SwiGLU MLP body.

    Grid: (row tiles [parallel], hidden tiles [arbitrary / reduction]).
    For each hidden tile k:
        g_k  = silu(x @ W1[:, k]) * silu(x @ W2[:, k])    # MXU + EUP/VPU, f32
        acc += g_k @ Wproj[k, :]                          # MXU, f32 accumulate
    The c_proj bias is folded into the k == 0 accumulator init; the output is
    stored on the last hidden tile.
    """
    k = pl.program_id(1)

    @pl.when(k == 0)
    def _():
        acc_ref[...] = jnp.broadcast_to(b_ref[...], acc_ref.shape)

    # Cast to the MXU compute dtype in-kernel (VPU pack hides under MXU/DMA);
    # avoids a separate HBM round-trip for a bf16 copy of x in the wrapper.
    x = x_ref[...].astype(compute_dtype)                               # (tm, C)

    # Plain NN matmuls on pre-transposed weight tiles -> native MXU lowering.
    h1 = jnp.dot(x, w1_ref[...], preferred_element_type=jnp.float32)  # (tm, ht)
    h2 = jnp.dot(x, w2_ref[...], preferred_element_type=jnp.float32)  # (tm, ht)
    g = jax.nn.silu(h1) * jax.nn.silu(h2)                              # f32; exp -> EUP

    acc_ref[...] += jnp.dot(g.astype(compute_dtype), wp_ref[...],
                            preferred_element_type=jnp.float32)        # (tm, C)

    @pl.when(k == pl.num_programs(1) - 1)
    def _():
        o_ref[...] = acc_ref[...].astype(o_ref.dtype)


# ---------------------------------------------------------------------------
# Generation-aware tiling helpers
# ---------------------------------------------------------------------------
def _vmem_budget_bytes() -> int:
    """Usable VMEM budget, leaving headroom for compiler-internal scratch."""
    phys = 64 * 1024 * 1024  # conservative default (v7x-sized part)
    try:
        info = pltpu.get_tpu_info()
        phys = int(getattr(info, "vmem_capacity_bytes", phys)) or phys
    except Exception:
        pass
    if phys <= 64 * 1024 * 1024:
        # 64 MiB parts (v7x): leave ~12 MiB for internal scratch / semaphores.
        return max(phys - 12 * 1024 * 1024, 32 * 1024 * 1024)
    # 128 MiB parts (v5e / v6e): raise the cap well past the 32 MiB scoped default.
    return min(phys - 16 * 1024 * 1024, 112 * 1024 * 1024)


def _num_tensorcores() -> int:
    """Best-effort count of TensorCores sharing this chip's HBM / grid."""
    try:
        dev = jax.devices()[0]
        kind = str(getattr(dev, "device_kind", "")).lower()
        if any(tag in kind for tag in ("7x", "v7", "v4", "v5p")):
            return 2
        n = getattr(dev, "num_cores", None)
        if isinstance(n, int) and n > 0:
            return n
    except Exception:
        pass
    return 1


def _choose_tiles(M, C, H, x_bytes, out_bytes, w_bytes, budget,
                  tile_m_max, hidden_tile_max, n_cores):
    """Pick (tm, ht).  tm (weight-reuse factor) is maximized first; ht only
    amortizes per-grid-step overhead, so it is shrunk first when VMEM is tight."""
    # tm: multiple of 16 (bf16 packs 2 rows / sublane), no bigger than needed.
    tm_cap = min(tile_m_max, max(16, _round_up(M, 16)))
    if n_cores > 1 and M > 16:
        # Feed every TensorCore: >= 1 row tile per core on the "parallel" axis.
        tm_cap = min(tm_cap, max(16, _round_up(-(-M // n_cores), 16)))

    tm_cands = sorted(
        {t for t in (1024, 896, 768, 640, 512, 448, 384, 320, 256, 192, 128,
                     96, 64, 48, 32, 16) if t <= tm_cap} | {tm_cap},
        reverse=True)

    # ht must divide H (reduction axis -> no masked garbage in the accumulator).
    # H is a multiple of 256 by construction, so 256/128 always qualify.
    ht_cands = [h for h in (1024, 768, 512, 384, 256, 128)
                if h <= min(hidden_tile_max, H) and H % h == 0] or [H]

    def footprint(tm, ht):
        return (2 * tm * C * x_bytes          # x row tile (double buffered)
                + 2 * tm * C * out_bytes      # output tile (double buffered)
                + tm * C * 4                  # f32 accumulator scratch
                + 3 * 2 * ht * C * w_bytes    # W1 / W2 / Wproj tiles (double buffered)
                + 2 * C * 4)                  # bias

    for tm in tm_cands:                       # biggest tm first (weight reuse)
        for ht in ht_cands:                   # then biggest ht that still fits
            if footprint(tm, ht) <= budget:
                return tm, ht
    return tm_cands[-1], ht_cands[-1]


# ---------------------------------------------------------------------------
# Wrapper
# ---------------------------------------------------------------------------
def prepare_mlp_params(w_fc1, w_fc2, w_proj, b_proj, compute_dtype=jnp.bfloat16):
    """One-time conversion (call OUTSIDE jit, at weight-load time) from PyTorch
    nn.Linear layout to the kernel layout / dtype:
        fc_1.weight   (H, C) -> (C, H) compute_dtype
        fc_2.weight   (H, C) -> (C, H) compute_dtype
        c_proj.weight (C, H) -> (H, C) compute_dtype
        c_proj.bias   (C,)   -> (1, C) float32
    """
    w1t = jnp.asarray(w_fc1).T.astype(compute_dtype)
    w2t = jnp.asarray(w_fc2).T.astype(compute_dtype)
    wpt = jnp.asarray(w_proj).T.astype(compute_dtype)
    b2 = jnp.asarray(b_proj).astype(jnp.float32).reshape(1, -1)
    return w1t, w2t, wpt, b2


def mlp_pallas(x, w1t, w2t, wpt, b2, *, tile_m=1024, hidden_tile=1024,
               compute_dtype=jnp.bfloat16):
    """Llama MLP forward:  c_proj(silu(fc_1(x)) * silu(fc_2(x))) + bias.

    x: (B, T, C) in any float dtype (cast to compute_dtype inside the kernel).
    w1t, w2t: (C, H); wpt: (H, C); b2: (1, C) -- from prepare_mlp_params.
    """
    B, T, C = x.shape
    H = w1t.shape[1]
    assert w1t.shape == (C, H) and w2t.shape == (C, H)
    assert wpt.shape == (H, C) and b2.shape == (1, C)

    M = B * T
    out_dtype = x.dtype

    xb = jnp.dtype(x.dtype).itemsize
    ob = jnp.dtype(out_dtype).itemsize
    wb = jnp.dtype(compute_dtype).itemsize

    budget = _vmem_budget_bytes()
    tm, ht = _choose_tiles(M, C, H, xb, ob, wb, budget, tile_m, hidden_tile,
                           _num_tensorcores())

    n_i = pl.cdiv(M, tm)      # ragged last row tile handled by Pallas store masking
    n_k = H // ht

    x2 = x.reshape(M, C)      # metadata-only; no cast / pad copies in the wrapper

    kernel = functools.partial(_mlp_kernel, compute_dtype=compute_dtype)

    cost = pl.CostEstimate(
        flops=6 * M * H * C,                        # three matmuls, 2*M*H*C each
        transcendentals=2 * M * H,                  # two silu exps per hidden element
        bytes_accessed=(M * C * (xb + ob)           # x in, out
                        + n_i * 3 * H * C * wb      # weights streamed per row tile
                        + C * 4))                   # bias

    out = pl.pallas_call(
        kernel,
        out_shape=jax.ShapeDtypeStruct((M, C), out_dtype),
        grid_spec=pltpu.PrefetchScalarGridSpec(
            num_scalar_prefetch=0,
            grid=(n_i, n_k),
            in_specs=[
                pl.BlockSpec((tm, C), lambda i, k: (i, 0)),   # x row tile
                pl.BlockSpec((C, ht), lambda i, k: (0, k)),   # fc_1 weight tile (C, H)
                pl.BlockSpec((C, ht), lambda i, k: (0, k)),   # fc_2 weight tile (C, H)
                pl.BlockSpec((ht, C), lambda i, k: (k, 0)),   # c_proj weight tile (H, C)
                pl.BlockSpec((1, C), lambda i, k: (0, 0)),    # c_proj bias (f32)
            ],
            out_specs=pl.BlockSpec((tm, C), lambda i, k: (i, 0)),
            scratch_shapes=[pltpu.VMEM((tm, C), jnp.float32)],
        ),
        compiler_params=pltpu.CompilerParams(
            dimension_semantics=("parallel", "arbitrary"),  # rows parallel, hidden reduce
            vmem_limit_bytes=int(budget),
        ),
        cost_estimate=cost,
    )(x2, w1t, w2t, wpt, b2)

    return out.reshape(B, T, C)


def mlp_reference(x, w_fc1, w_fc2, w_proj, b_proj, compute_dtype=jnp.bfloat16):
    """Pure-JAX reference (PyTorch weight layouts) mirroring the kernel's precision
    policy (bf16 matmul operands, f32 accumulation):
        silu(fc_1(x)) * silu(fc_2(x)) -> c_proj(.) + bias
    """
    cd = compute_dtype
    xc = x.astype(cd)
    h1 = jnp.einsum("btc,hc->bth", xc, w_fc1.astype(cd),
                    preferred_element_type=jnp.float32)
    h2 = jnp.einsum("btc,hc->bth", xc, w_fc2.astype(cd),
                    preferred_element_type=jnp.float32)
    g = (jax.nn.silu(h1) * jax.nn.silu(h2)).astype(cd)
    out = jnp.einsum("bth,ch->btc", g, w_proj.astype(cd),
                     preferred_element_type=jnp.float32) + b_proj.astype(jnp.float32)
    return out.astype(x.dtype)


if __name__ == "__main__":
    # baby_llama config: n_embd=128 -> hidden_dim=512 -> n_hidden=find_multiple(341,256)=512
    n_embd = 128
    hidden_dim = 4 * n_embd
    n_hidden = find_multiple(int(2 * hidden_dim / 3), 256)   # 512

    B, T = 2, 8

    key = jax.random.PRNGKey(0)
    kx, k1, k2, k3, k4 = jax.random.split(key, 5)

    x = jax.random.normal(kx, (B, T, n_embd), dtype=jnp.float32)
    # PyTorch nn.Linear layout: (out_features, in_features); small init scale.
    w_fc1 = jax.random.normal(k1, (n_hidden, n_embd), dtype=jnp.float32) * 0.02
    w_fc2 = jax.random.normal(k2, (n_hidden, n_embd), dtype=jnp.float32) * 0.02
    w_proj = jax.random.normal(k3, (n_embd, n_hidden), dtype=jnp.float32) * 0.02
    b_proj = jax.random.normal(k4, (n_embd,), dtype=jnp.float32) * 0.02

    # One-time weight layout / dtype conversion (outside the jit'd hot path).
    w1t, w2t, wpt, b2 = prepare_mlp_params(w_fc1, w_fc2, w_proj, b_proj,
                                           compute_dtype=jnp.bfloat16)

    run = jax.jit(functools.partial(mlp_pallas, compute_dtype=jnp.bfloat16))
    y = run(x, w1t, w2t, wpt, b2)
    jax.block_until_ready(y)

    y_ref = mlp_reference(x, w_fc1, w_fc2, w_proj, b_proj, compute_dtype=jnp.bfloat16)
    assert y.shape == (B, T, n_embd) and y.dtype == x.dtype
    max_err = float(jnp.max(jnp.abs(y - y_ref)))
    assert jnp.allclose(y, y_ref, atol=2e-3, rtol=2e-2), f"mismatch vs reference: {max_err}"

    print("KERNEL_OK")
</pallas_src>

<mosaic_0001>
module attributes {stable_mosaic.version = 11 : i64} {
  func.func @_mlp_kernel(%arg0: i32, %arg1: i32, %arg2: memref<16x128xf32, #tpu.memory_space<vmem>>, %arg3: memref<128x512xbf16, #tpu.memory_space<vmem>>, %arg4: memref<128x512xbf16, #tpu.memory_space<vmem>>, %arg5: memref<512x128xbf16, #tpu.memory_space<vmem>>, %arg6: memref<1x128xf32, #tpu.memory_space<vmem>>, %arg7: memref<16x128xf32, #tpu.memory_space<vmem>>, %arg8: memref<16x128xf32, #tpu.memory_space<vmem>>) attributes {dimension_semantics = [#tpu.dimension_semantics<parallel>, #tpu.dimension_semantics<arbitrary>], iteration_bounds = array<i64: 1, 1>, scalar_prefetch = 0 : i64, scratch_operands = 1 : i64, tpu.core_type = #tpu.core_type<tc>, window_params = [{transform_indices = @transform_0, window_bounds = array<i64: 16, 128>}, {transform_indices = @transform_1, window_bounds = array<i64: 128, 512>}, {transform_indices = @transform_2, window_bounds = array<i64: 128, 512>}, {transform_indices = @transform_3, window_bounds = array<i64: 512, 128>}, {pipeline_mode = #tpu.pipeline_mode<synchronous>, transform_indices = @transform_4, window_bounds = array<i64: 1, 128>}, {transform_indices = @transform_5, window_bounds = array<i64: 16, 128>}]} {
    %c0_i32 = arith.constant 0 : i32
    %0 = arith.cmpi eq, %arg1, %c0_i32 : i32
    %1 = arith.extui %0 : i1 to i32
    %c0_i32_0 = arith.constant 0 : i32
    %2 = arith.cmpi ne, %1, %c0_i32_0 : i32
    scf.if %2 {
      %c0_18 = arith.constant 0 : index
      %c0_19 = arith.constant 0 : index
      %31 = vector.load %arg6[%c0_18, %c0_19] : memref<1x128xf32, #tpu.memory_space<vmem>>, vector<1x128xf32>
      %32 = vector.shape_cast %31 : vector<1x128xf32> to vector<1x128xf32>
      %33 = vector.broadcast %32 : vector<1x128xf32> to vector<16x128xf32>
      %c0_20 = arith.constant 0 : index
      %c0_21 = arith.constant 0 : index
      %34 = vector.load %arg8[%c0_20, %c0_21] : memref<16x128xf32, #tpu.memory_space<vmem>>, vector<16x128xf32>
      tpu.vector_store %arg8[%c0_20, %c0_21], %33 {strides = array<i32>} : memref<16x128xf32, #tpu.memory_space<vmem>>, vector<16x128xf32>,
    } else {
    }
    %c0 = arith.constant 0 : index
    %c0_1 = arith.constant 0 : index
    %3 = vector.load %arg2[%c0, %c0_1] : memref<16x128xf32, #tpu.memory_space<vmem>>, vector<16x128xf32>
    %4 = arith.truncf %3 : vector<16x128xf32> to vector<16x128xbf16>
    %c0_2 = arith.constant 0 : index
    %c0_3 = arith.constant 0 : index
    %5 = vector.load %arg3[%c0_2, %c0_3] : memref<128x512xbf16, #tpu.memory_space<vmem>>, vector<128x512xbf16>
    %cst = arith.constant dense<0.000000e+00> : vector<16x512xf32>
    %6 = tpu.matmul %4, %5, %cst {dimension_numbers = #tpu.dot_dimension_numbers<[1], [0], [0], [1], [0, 0, 1, 1], [], []>} : vector<16x128xbf16>, vector<128x512xbf16>, vector<16x512xf32> -> vector<16x512xf32>
    %c0_4 = arith.constant 0 : index
    %c0_5 = arith.constant 0 : index
    %7 = vector.load %arg4[%c0_4, %c0_5] : memref<128x512xbf16, #tpu.memory_space<vmem>>, vector<128x512xbf16>
    %cst_6 = arith.constant dense<0.000000e+00> : vector<16x512xf32>
    %8 = tpu.matmul %4, %7, %cst_6 {dimension_numbers = #tpu.dot_dimension_numbers<[1], [0], [0], [1], [0, 0, 1, 1], [], []>} : vector<16x128xbf16>, vector<128x512xbf16>, vector<16x512xf32> -> vector<16x512xf32>
    %9 = arith.negf %6 : vector<16x512xf32>
    %10 = math.exp %9 : vector<16x512xf32>
    %cst_7 = arith.constant 1.000000e+00 : f32
    %11 = vector.broadcast %cst_7 : f32 to vector<16x512xf32>
    %12 = arith.addf %11, %10 : vector<16x512xf32>
    %13 = arith.divf %11, %12 : vector<16x512xf32>
    %14 = arith.mulf %6, %13 : vector<16x512xf32>
    %15 = arith.negf %8 : vector<16x512xf32>
    %16 = math.exp %15 : vector<16x512xf32>
    %cst_8 = arith.constant 1.000000e+00 : f32
    %17 = vector.broadcast %cst_8 : f32 to vector<16x512xf32>
    %18 = arith.addf %17, %16 : vector<16x512xf32>
    %19 = arith.divf %17, %18 : vector<16x512xf32>
    %20 = arith.mulf %8, %19 : vector<16x512xf32>
    %21 = arith.mulf %14, %20 : vector<16x512xf32>
    %c0_9 = arith.constant 0 : index
    %c0_10 = arith.constant 0 : index
    %22 = vector.load %arg8[%c0_9, %c0_10] : memref<16x128xf32, #tpu.memory_space<vmem>>, vector<16x128xf32>
    %23 = arith.truncf %21 : vector<16x512xf32> to vector<16x512xbf16>
    %c0_11 = arith.constant 0 : index
    %c0_12 = arith.constant 0 : index
    %24 = vector.load %arg5[%c0_11, %c0_12] : memref<512x128xbf16, #tpu.memory_space<vmem>>, vector<512x128xbf16>
    %cst_13 = arith.constant dense<0.000000e+00> : vector<16x128xf32>
    %25 = tpu.matmul %23, %24, %cst_13 {dimension_numbers = #tpu.dot_dimension_numbers<[1], [0], [0], [1], [0, 0, 1, 1], [], []>} : vector<16x512xbf16>, vector<512x128xbf16>, vector<16x128xf32> -> vector<16x128xf32>
    %26 = arith.addf %22, %25 : vector<16x128xf32>
    %c0_14 = arith.constant 0 : index
    %c0_15 = arith.constant 0 : index
    %27 = vector.load %arg8[%c0_14, %c0_15] : memref<16x128xf32, #tpu.memory_space<vmem>>, vector<16x128xf32>
    tpu.vector_store %arg8[%c0_14, %c0_15], %26 {strides = array<i32>} : memref<16x128xf32, #tpu.memory_space<vmem>>, vector<16x128xf32>,
    %c0_i32_16 = arith.constant 0 : i32
    %28 = arith.cmpi eq, %arg1, %c0_i32_16 : i32
    %29 = arith.extui %28 : i1 to i32
    %c0_i32_17 = arith.constant 0 : i32
    %30 = arith.cmpi ne, %29, %c0_i32_17 : i32
    scf.if %30 {
      %c0_18 = arith.constant 0 : index
      %c0_19 = arith.constant 0 : index
      %31 = vector.load %arg8[%c0_18, %c0_19] : memref<16x128xf32, #tpu.memory_space<vmem>>, vector<16x128xf32>
      %c0_20 = arith.constant 0 : index
      %c0_21 = arith.constant 0 : index
      %32 = vector.load %arg7[%c0_20, %c0_21] : memref<16x128xf32, #tpu.memory_space<vmem>>, vector<16x128xf32>
      tpu.vector_store %arg7[%c0_20, %c0_21], %31 {strides = array<i32>} : memref<16x128xf32, #tpu.memory_space<vmem>>, vector<16x128xf32>,
    } else {
    }
    return
  }
  func.func @transform_0(%arg0: i32, %arg1: i32) -> (i32, i32) {
    %c0_i32 = arith.constant 0 : i32
    %c0_i32_0 = arith.constant 0 : i32
    return %arg0, %c0_i32 : i32, i32
  }
  func.func @transform_1(%arg0: i32, %arg1: i32) -> (i32, i32) {
    %c0_i32 = arith.constant 0 : i32
    %c0_i32_0 = arith.constant 0 : i32
    return %c0_i32, %arg1 : i32, i32
  }
  func.func @transform_2(%arg0: i32, %arg1: i32) -> (i32, i32) {
    %c0_i32 = arith.constant 0 : i32
    %c0_i32_0 = arith.constant 0 : i32
    return %c0_i32, %arg1 : i32, i32
  }
  func.func @transform_3(%arg0: i32, %arg1: i32) -> (i32, i32) {
    %c0_i32 = arith.constant 0 : i32
    %c0_i32_0 = arith.constant 0 : i32
    return %arg1, %c0_i32 : i32, i32
  }
  func.func @transform_4(%arg0: i32, %arg1: i32) -> (i32, i32) {
    %c0_i32 = arith.constant 0 : i32
    %c0_i32_0 = arith.constant 0 : i32
    %c0_i32_1 = arith.constant 0 : i32
    return %c0_i32, %c0_i32_0 : i32, i32
  }
  func.func @transform_5(%arg0: i32, %arg1: i32) -> (i32, i32) {
    %c0_i32 = arith.constant 0 : i32
    %c0_i32_0 = arith.constant 0 : i32
    return %arg0, %c0_i32 : i32, i32
  }
}

</mosaic_0001>

<llo_original>
// kernel: mlp_pallas.1
$region0: #{mlp_pallas.1}
  #allocation0 [shape = 'u32[]', space=smem, size = 0x4, offset = 0x4, fixed_abs, tag = 'smem constant byte address 0x4 - core index']
  #allocation1 [shape = 'u32[144,128]{1,0:T(1,128)}', space=vmem, size = 0x12000, scoped, tag = 'internal scratch']
  #allocation2 [shape = 'f32[16,128]{1,0:T(8,128)}', space=vmem, size = 0x2000, scoped, tag = 'scratch operand']
  %s0 = inlined_call_operand.hbm [shape: f32[16,128], index: 0, kind: input, shape index: {}]
  %s1 = inlined_call_operand.hbm [shape: bf16[128,512], index: 1, kind: input, shape index: {}]
  %s2 = inlined_call_operand.hbm [shape: bf16[128,512], index: 2, kind: input, shape index: {}]
  %s3 = inlined_call_operand.hbm [shape: bf16[512,128], index: 3, kind: input, shape index: {}]
  %s4 = inlined_call_operand.vmem [shape: f32[1,128], index: 4, kind: input, shape index: {}]
  %s5 = inlined_call_operand.hbm [shape: f32[16,128], index: 5, kind: output, shape index: {}]
  %s6 = sld [smem:[#allocation0]]
  $region54: #{mlp_pallas.1} parent=0
    _
  %s8 = ssub.s32 1, %s6
  %s9 = scalar_select 0, %s8, %s6
  $region1: #{mlp_pallas.1} parent=0
    #allocation3 [shape = 'u8[8192]{0}', space=vmem, size = 0x2000, scoped, tag = 'input window, operand 0, single buffered']
    #allocation4 [shape = 's32[1]{0}', space=sflag, size = 0x4, scoped, tag = 'scoped memory for mlp_pallas.1']
    #allocation5 [shape = 's32[1]{0}', space=sflag, size = 0x4, scoped, tag = 'scoped memory for mlp_pallas.1']
    #allocation6 [shape = 'u8[131072]{0}', space=vmem, size = 0x20000, scoped, tag = 'input window, operand 1, single buffered']
    #allocation7 [shape = 's32[1]{0}', space=sflag, size = 0x4, scoped, tag = 'scoped memory for mlp_pallas.1']
    #allocation8 [shape = 'u8[131072]{0}', space=vmem, size = 0x20000, scoped, tag = 'input window, operand 2, single buffered']
    #allocation9 [shape = 'u8[131072]{0}', space=vmem, size = 0x20000, scoped, tag = 'input window, operand 3, single buffered']
    #allocation10 [shape = 's32[1]{0}', space=sflag, size = 0x4, scoped, tag = 'scoped memory for mlp_pallas.1']
    #allocation11 [shape = 'u8[8192]{0}', space=vmem, size = 0x2000, scoped, tag = 'output window, operand 0, single buffered']
    %10 = vsyncpa [#allocation4], 0
    %11 = vsyncpa [#allocation7], 0
    %12 = vsyncpa [#allocation10], 0
    %13 = vsyncpa [#allocation5], 0
    // Predicated region
    $region2: #{mlp_pallas.1} parent=1 // pred_check
      _
    $region3: #{mlp_pallas.1} parent=1 // pred_check_branch
      %15 = sbr.rel (0) target = $region5
    $region4: #{mlp_pallas.1} parent=1 // pred_region
      %s17 = ssub.s32 256, 256
      %18 = vsyncadd [#allocation4], %s17
      %s19 = sshll.u32 [#allocation3], 4
      %s20 = int_to_ptr.vmem [resolvable:$true] %s19
      %25 = dma.hbm_to_vmem [thread:$0]  %s0, 256, %s20, [#allocation4], 128, 128, 8
    $region5: #{mlp_pallas.1} parent=1 // pred_fallthru
      _
    // Predicated region
    $region6: #{mlp_pallas.1} parent=1 // pred_check
      _
    $region7: #{mlp_pallas.1} parent=1 // pred_check_branch
      %27 = sbr.rel (0) target = $region9
    $region8: #{mlp_pallas.1} parent=1 // pred_region
      %s29 = ssub.s32 4096, 4096
      %30 = vsyncadd [#allocation7], %s29
      %s31 = sshll.u32 [#allocation6], 4
      %s32 = int_to_ptr.vmem [resolvable:$true] %s31
      %37 = dma.hbm_to_vmem [thread:$0]  %s1, 4096, %s32, [#allocation7], 256, 256, 16
    $region9: #{mlp_pallas.1} parent=1 // pred_fallthru
      _
    // Predicated region
    $region10: #{mlp_pallas.1} parent=1 // pred_check
      _
    $region11: #{mlp_pallas.1} parent=1 // pred_check_branch
      %39 = sbr.rel (0) target = $region13
    $region12: #{mlp_pallas.1} parent=1 // pred_region
      %s41 = ssub.s32 4096, 4096
      %42 = vsyncadd [#allocation7], %s41
      %s43 = sshll.u32 [#allocation8], 4
      %s44 = int_to_ptr.vmem [resolvable:$true] %s43
      %49 = dma.hbm_to_vmem [thread:$0]  %s2, 4096, %s44, [#allocation7], 256, 256, 16
    $region13: #{mlp_pallas.1} parent=1 // pred_fallthru
      _
    // Predicated region
    $region14: #{mlp_pallas.1} parent=1 // pred_check
      _
    $region15: #{mlp_pallas.1} parent=1 // pred_check_branch
      %51 = sbr.rel (0) target = $region17
    $region16: #{mlp_pallas.1} parent=1 // pred_region
      %s53 = ssub.s32 4096, 4096
      %54 = vsyncadd [#allocation10], %s53
      %s55 = sshll.u32 [#allocation9], 4
      %s56 = int_to_ptr.vmem [resolvable:$true] %s55
      %61 = dma.hbm_to_vmem [thread:$0]  %s3, 4096, %s56, [#allocation10], 64, 64, 4
    $region17: #{mlp_pallas.1} parent=1 // pred_fallthru
      _
    // Predicated region
    $region18: #{mlp_pallas.1} parent=1 // pred_check
      _
    $region19: #{mlp_pallas.1} parent=1 // pred_check_branch
      %63 = sbr.rel (0) target = $region21
    $region20: #{mlp_pallas.1} parent=1 // pred_region
      _
    $region21: #{mlp_pallas.1} parent=1 // pred_fallthru
      _
    // Predicated region
    $region22: #{mlp_pallas.1} parent=1 // pred_check
      _
    $region23: #{mlp_pallas.1} parent=1 // pred_check_branch
      %65 = sbr.rel (0) target = $region25
    $region24: #{mlp_pallas.1} parent=1 // pred_region
      %66 = dma.done [#allocation4], 256
    $region25: #{mlp_pallas.1} parent=1 // pred_fallthru
      _
    // Predicated region
    $region26: #{mlp_pallas.1} parent=1 // pred_check
      _
    $region27: #{mlp_pallas.1} parent=1 // pred_check_branch
      %68 = sbr.rel (0) target = $region29
    $region28: #{mlp_pallas.1} parent=1 // pred_region
      %69 = dma.done [#allocation7], 4096
    $region29: #{mlp_pallas.1} parent=1 // pred_fallthru
      _
    // Predicated region
    $region30: #{mlp_pallas.1} parent=1 // pred_check
      _
    $region31: #{mlp_pallas.1} parent=1 // pred_check_branch
      %71 = sbr.rel (0) target = $region33
    $region32: #{mlp_pallas.1} parent=1 // pred_region
      %72 = dma.done [#allocation7], 4096
    $region33: #{mlp_pallas.1} parent=1 // pred_fallthru
      _
    // Predicated region
    $region34: #{mlp_pallas.1} parent=1 // pred_check
      _
    $region35: #{mlp_pallas.1} parent=1 // pred_check_branch
      %74 = sbr.rel (0) target = $region37
    $region36: #{mlp_pallas.1} parent=1 // pred_region
      %75 = dma.done [#allocation10], 4096
    $region37: #{mlp_pallas.1} parent=1 // pred_fallthru
      _
    %p77 = scmp.eq.s32.totalorder 0, 0
    // Predicated region
    $region38: #{mlp_pallas.1} parent=1 // pred_check
      %p78 = pneg %p77
    $region39: #{mlp_pallas.1} parent=1 // pred_check_branch
      %80 = sbr.rel (%p78) target = $region41
    $region40: #{mlp_pallas.1} parent=1 // pred_region
      %v81 = vld [vmem:[%s4] sm:$0x1]
      %v83 = vlaneseq
      %v84 = vshrl.u32 %v83, 7
      %v85 = vsub.s32 0, %v84
      %v86 = vrot.slane %v81, %v85
      %88 = vst [vmem:[#allocation2] sm:$0xff] %v86
      %89 = vst [vmem:[#allocation2 + $0x8] sm:$0xff] %v86
    $region41: #{mlp_pallas.1} parent=1 // pred_fallthru
      _
    %v90 = vld [vmem:[#allocation3] sm:$0xff]
    %v91 = vld [vmem:[#allocation3 + $0x8] sm:$0xff]
    %v92 = vpack.c.bf16 %v91, %v90
    %v93 = vld [vmem:[#allocation6] sm:$0xff]
    %v94 = vld [vmem:[#allocation6 + $0x8] sm:$0xff]
    %v95 = vld [vmem:[#allocation6 + $0x10] sm:$0xff]
    %v96 = vld [vmem:[#allocation6 + $0x18] sm:$0xff]
    %v97 = vld [vmem:[#allocation6 + $0x20] sm:$0xff]
    %v98 = vld [vmem:[#allocation6 + $0x28] sm:$0xff]
    %v99 = vld [vmem:[#allocation6 + $0x30] sm:$0xff]
    %v100 = vld [vmem:[#allocation6 + $0x38] sm:$0xff]
    %v101 = vld [vmem:[#allocation6 + $0x40] sm:$0xff]
    %v102 = vld [vmem:[#allocation6 + $0x48] sm:$0xff]
    %v103 = vld [vmem:[#allocation6 + $0x50] sm:$0xff]
    %v104 = vld [vmem:[#allocation6 + $0x58] sm:$0xff]
    %v105 = vld [vmem:[#allocation6 + $0x60] sm:$0xff]
    %v106 = vld [vmem:[#allocation6 + $0x68] sm:$0xff]
    %v107 = vld [vmem:[#allocation6 + $0x70] sm:$0xff]
    %v108 = vld [vmem:[#allocation6 + $0x78] sm:$0xff]
    %v109 = vld [vmem:[#allocation6 + $0x80] sm:$0xff]
    %v110 = vld [vmem:[#allocation6 + $0x88] sm:$0xff]
    %v111 = vld [vmem:[#allocation6 + $0x90] sm:$0xff]
    %v112 = vld [vmem:[#allocation6 + $0x98] sm:$0xff]
    %v113 = vld [vmem:[#allocation6 + $0xa0] sm:$0xff]
    %v114 = vld [vmem:[#allocation6 + $0xa8] sm:$0xff]
    %v115 = vld [vmem:[#allocation6 + $0xb0] sm:$0xff]
    %v116 = vld [vmem:[#allocation6 + $0xb8] sm:$0xff]
    %v117 = vld [vmem:[#allocation6 + $0xc0] sm:$0xff]
    %v118 = vld [vmem:[#allocation6 + $0xc8] sm:$0xff]
    %v119 = vld [vmem:[#allocation6 + $0xd0] sm:$0xff]
    %v120 = vld [vmem:[#allocation6 + $0xd8] sm:$0xff]
    %v121 = vld [vmem:[#allocation6 + $0xe0] sm:$0xff]
    %v122 = vld [vmem:[#allocation6 + $0xe8] sm:$0xff]
    %v123 = vld [vmem:[#allocation6 + $0xf0] sm:$0xff]
    %v124 = vld [vmem:[#allocation6 + $0xf8] sm:$0xff]
    %v157 = vunpack.c.l.b16 %v93
    %v158 = vunpack.c.h.b16 %v93
    %v159 = vunpack.c.l.b16 %v94
    %v160 = vunpack.c.h.b16 %v94
    %v161 = vunpack.c.l.b16 %v95
    %v162 = vunpack.c.h.b16 %v95
    %v163 = vunpack.c.l.b16 %v96
    %v164 = vunpack.c.h.b16 %v96
    %v165 = vunpack.c.l.b16 %v97
    %v166 = vunpack.c.h.b16 %v97
    %v167 = vunpack.c.l.b16 %v98
    %v168 = vunpack.c.h.b16 %v98
    %v169 = vunpack.c.l.b16 %v99
    %v170 = vunpack.c.h.b16 %v99
    %v171 = vunpack.c.l.b16 %v100
    %v172 = vunpack.c.h.b16 %v100
    %v173 = vunpack.c.l.b16 %v101
    %v174 = vunpack.c.h.b16 %v101
    %v175 = vunpack.c.l.b16 %v102
    %v176 = vunpack.c.h.b16 %v102
    %v177 = vunpack.c.l.b16 %v103
    %v178 = vunpack.c.h.b16 %v103
    %v179 = vunpack.c.l.b16 %v104
    %v180 = vunpack.c.h.b16 %v104
    %v181 = vunpack.c.l.b16 %v105
    %v182 = vunpack.c.h.b16 %v105
    %v183 = vunpack.c.l.b16 %v106
    %v184 = vunpack.c.h.b16 %v106
    %v185 = vunpack.c.l.b16 %v107
    %v186 = vunpack.c.h.b16 %v107
    %v187 = vunpack.c.l.b16 %v108
    %v188 = vunpack.c.h.b16 %v108
    %v189 = vunpack.c.l.b16 %v109
    %v190 = vunpack.c.h.b16 %v109
    %v191 = vunpack.c.l.b16 %v110
    %v192 = vunpack.c.h.b16 %v110
    %v193 = vunpack.c.l.b16 %v111
    %v194 = vunpack.c.h.b16 %v111
    %v195 = vunpack.c.l.b16 %v112
    %v196 = vunpack.c.h.b16 %v112
    %v197 = vunpack.c.l.b16 %v113
    %v198 = vunpack.c.h.b16 %v113
    %v199 = vunpack.c.l.b16 %v114
    %v200 = vunpack.c.h.b16 %v114
    %v201 = vunpack.c.l.b16 %v115
    %v202 = vunpack.c.h.b16 %v115
    %v203 = vunpack.c.l.b16 %v116
    %v204 = vunpack.c.h.b16 %v116
    %v205 = vunpack.c.l.b16 %v117
    %v206 = vunpack.c.h.b16 %v117
    %v207 = vunpack.c.l.b16 %v118
    %v208 = vunpack.c.h.b16 %v118
    %v209 = vunpack.c.l.b16 %v119
    %v210 = vunpack.c.h.b16 %v119
    %v211 = vunpack.c.l.b16 %v120
    %v212 = vunpack.c.h.b16 %v120
    %v213 = vunpack.c.l.b16 %v121
    %v214 = vunpack.c.h.b16 %v121
    %v215 = vunpack.c.l.b16 %v122
    %v216 = vunpack.c.h.b16 %v122
    %v217 = vunpack.c.l.b16 %v123
    %v218 = vunpack.c.h.b16 %v123
    %v219 = vunpack.c.l.b16 %v124
    %v220 = vunpack.c.h.b16 %v124
    %v221 = vpack.c.b16 %v161, %v157
    %v222 = vpack.c.b16 %v162, %v158
    %v223 = vpack.c.b16 %v163, %v159
    %v224 = vpack.c.b16 %v164, %v160
    %v225 = vpack.c.b16 %v169, %v165
    %v226 = vpack.c.b16 %v170, %v166
    %v227 = vpack.c.b16 %v171, %v167
    %v228 = vpack.c.b16 %v172, %v168
    %v229 = vpack.c.b16 %v177, %v173
    %v230 = vpack.c.b16 %v178, %v174
    %v231 = vpack.c.b16 %v179, %v175
    %v232 = vpack.c.b16 %v180, %v176
    %v233 = vpack.c.b16 %v185, %v181
    %v234 = vpack.c.b16 %v186, %v182
    %v235 = vpack.c.b16 %v187, %v183
    %v236 = vpack.c.b16 %v188, %v184
    %v237 = vpack.c.b16 %v193, %v189
    %v238 = vpack.c.b16 %v194, %v190
    %v239 = vpack.c.b16 %v195, %v191
    %v240 = vpack.c.b16 %v196, %v192
    %v241 = vpack.c.b16 %v201, %v197
    %v242 = vpack.c.b16 %v202, %v198
    %v243 = vpack.c.b16 %v203, %v199
    %v244 = vpack.c.b16 %v204, %v200
    %v245 = vpack.c.b16 %v209, %v205
    %v246 = vpack.c.b16 %v210, %v206
    %v247 = vpack.c.b16 %v211, %v207
    %v248 = vpack.c.b16 %v212, %v208
    %v249 = vpack.c.b16 %v217, %v213
    %v250 = vpack.c.b16 %v218, %v214
    %v251 = vpack.c.b16 %v219, %v215
    %v252 = vpack.c.b16 %v220, %v216
    %285 = vmatprep.subr.bf16.mxu0 %v222
    %286 = vmatpush1.bf16.msra.mxu0 %v221
    %287 = vmatprep.subr.bf16.mxu0 %v226
    %288 = vmatpush1.bf16.msra.mxu0 %v225
    %289 = vmatprep.subr.bf16.mxu0 %v230
    %290 = vmatpush1.bf16.msra.mxu0 %v229
    %291 = vmatprep.subr.bf16.mxu0 %v234
    %292 = vmatpush1.bf16.msra.mxu0 %v233
    %293 = vmatprep.subr.bf16.mxu0 %v238
    %294 = vmatpush1.bf16.msra.mxu0 %v237
    %295 = vmatprep.subr.bf16.mxu0 %v242
    %296 = vmatpush1.bf16.msra.mxu0 %v241
    %297 = vmatprep.subr.bf16.mxu0 %v246
    %298 = vmatpush1.bf16.msra.mxu0 %v245
    %299 = vmatprep.subr.bf16.mxu0 %v250
    %300 = vmatpush1.bf16.msra.mxu0 %v249
    %301 = vmatprep.subr.bf16.mxu0 0
    %302 = vmatpush1.bf16.msra.mxu0 0
    %303 = vmatprep.subr.bf16.mxu0 0
    %304 = vmatpush1.bf16.msra.mxu0 0
    %305 = vmatprep.subr.bf16.mxu0 0
    %306 = vmatpush1.bf16.msra.mxu0 0
    %307 = vmatprep.subr.bf16.mxu0 0
    %308 = vmatpush1.bf16.msra.mxu0 0
    %309 = vmatprep.subr.bf16.mxu0 0
    %310 = vmatpush1.bf16.msra.mxu0 0
    %311 = vmatprep.subr.bf16.mxu0 0
    %312 = vmatpush1.bf16.msra.mxu0 0
    %313 = vmatprep.subr.bf16.mxu0 0
    %314 = vmatpush1.bf16.msra.mxu0 0
    %315 = vmatprep.subr.bf16.mxu0 0
    %316 = vmatpush1.bf16.msra.mxu0 0
    %317 = vmatprep.mubr.bf16.mxu0 0
    %318 = vmatmul.mubr.bf16.gmra.mrb[0].mxu0 %v92
    %v319 = vpop.f32.mrb[0].mxu0
    %v320 = vadd.f32 0.0, %v319
    %v321 = vpop.f32.mrb[0].mxu0
    %v322 = vadd.f32 0.0, %v321
    %v323 = vpop.f32.mrb[0].mxu0
    %v324 = vadd.f32 0.0, %v323
    %v325 = vpop.f32.mrb[0].mxu0
    %v326 = vadd.f32 0.0, %v325
    %327 = vdwg.mxu0
    %328 = vmatprep.subr.bf16.mxu0 %v224
    %329 = vmatpush1.bf16.msra.mxu0 %v223
    %330 = vmatprep.subr.bf16.mxu0 %v228
    %331 = vmatpush1.bf16.msra.mxu0 %v227
    %332 = vmatprep.subr.bf16.mxu0 %v232
    %333 = vmatpush1.bf16.msra.mxu0 %v231
    %334 = vmatprep.subr.bf16.mxu0 %v236
    %335 = vmatpush1.bf16.msra.mxu0 %v235
    %336 = vmatprep.subr.bf16.mxu0 %v240
    %337 = vmatpush1.bf16.msra.mxu0 %v239
    %338 = vmatprep.subr.bf16.mxu0 %v244
    %339 = vmatpush1.bf16.msra.mxu0 %v243
    %340 = vmatprep.subr.bf16.mxu0 %v248
    %341 = vmatpush1.bf16.msra.mxu0 %v247
    %342 = vmatprep.subr.bf16.mxu0 %v252
    %343 = vmatpush1.bf16.msra.mxu0 %v251
    %344 = vmatprep.subr.bf16.mxu0 0
    %345 = vmatpush1.bf16.msra.mxu0 0
    %346 = vmatprep.subr.bf16.mxu0 0
    %347 = vmatpush1.bf16.msra.mxu0 0
    %348 = vmatprep.subr.bf16.mxu0 0
    %349 = vmatpush1.bf16.msra.mxu0 0
    %350 = vmatprep.subr.bf16.mxu0 0
    %351 = vmatpush1.bf16.msra.mxu0 0
    %352 = vmatprep.subr.bf16.mxu0 0
    %353 = vmatpush1.bf16.msra.mxu0 0
    %354 = vmatprep.subr.bf16.mxu0 0
    %355 = vmatpush1.bf16.msra.mxu0 0
    %356 = vmatprep.subr.bf16.mxu0 0
    %357 = vmatpush1.bf16.msra.mxu0 0
    %358 = vmatprep.subr.bf16.mxu0 0
    %359 = vmatpush1.bf16.msra.mxu0 0
    %360 = vmatprep.mubr.bf16.mxu0 0
    %361 = vmatmul.mubr.bf16.gmra.mrb[0].mxu0 %v92
    %v362 = vpop.f32.mrb[0].mxu0
    %v363 = vadd.f32 0.0, %v362
    %v364 = vpop.f32.mrb[0].mxu0
    %v365 = vadd.f32 0.0, %v364
    %v366 = vpop.f32.mrb[0].mxu0
    %v367 = vadd.f32 0.0, %v366
    %v368 = vpop.f32.mrb[0].mxu0
    %v369 = vadd.f32 0.0, %v368
    %370 = vdwg.mxu0
    %v371 = vld [vmem:[#allocation8] sm:$0xff]
    %v372 = vld [vmem:[#allocation8 + $0x8] sm:$0xff]
    %v373 = vld [vmem:[#allocation8 + $0x10] sm:$0xff]
    %v374 = vld [vmem:[#allocation8 + $0x18] sm:$0xff]
    %v375 = vld [vmem:[#allocation8 + $0x20] sm:$0xff]
    %v376 = vld [vmem:[#allocation8 + $0x28] sm:$0xff]
    %v377 = vld [vmem:[#allocation8 + $0x30] sm:$0xff]
    %v378 = vld [vmem:[#allocation8 + $0x38] sm:$0xff]
    %v379 = vld [vmem:[#allocation8 + $0x40] sm:$0xff]
    %v380 = vld [vmem:[#allocation8 + $0x48] sm:$0xff]
    %v381 = vld [vmem:[#allocation8 + $0x50] sm:$0xff]
    %v382 = vld [vmem:[#allocation8 + $0x58] sm:$0xff]
    %v383 = vld [vmem:[#allocation8 + $0x60] sm:$0xff]
    %v384 = vld [vmem:[#allocation8 + $0x68] sm:$0xff]
    %v385 = vld [vmem:[#allocation8 + $0x70] sm:$0xff]
    %v386 = vld [vmem:[#allocation8 + $0x78] sm:$0xff]
    %v387 = vld [vmem:[#allocation8 + $0x80] sm:$0xff]
    %v388 = vld [vmem:[#allocation8 + $0x88] sm:$0xff]
    %v389 = vld [vmem:[#allocation8 + $0x90] sm:$0xff]
    %v390 = vld [vmem:[#allocation8 + $0x98] sm:$0xff]
    %v391 = vld [vmem:[#allocation8 + $0xa0] sm:$0xff]
    %v392 = vld [vmem:[#allocation8 + $0xa8] sm:$0xff]
    %v393 = vld [vmem:[#allocation8 + $0xb0] sm:$0xff]
    %v394 = vld [vmem:[#allocation8 + $0xb8] sm:$0xff]
    %v395 = vld [vmem:[#allocation8 + $0xc0] sm:$0xff]
    %v396 = vld [vmem:[#allocation8 + $0xc8] sm:$0xff]
    %v397 = vld [vmem:[#allocation8 + $0xd0] sm:$0xff]
    %v398 = vld [vmem:[#allocation8 + $0xd8] sm:$0xff]
    %v399 = vld [vmem:[#allocation8 + $0xe0] sm:$0xff]
    %v400 = vld [vmem:[#allocation8 + $0xe8] sm:$0xff]
    %v401 = vld [vmem:[#allocation8 + $0xf0] sm:$0xff]
    %v402 = vld [vmem:[#allocation8 + $0xf8] sm:$0xff]
    %v435 = vunpack.c.l.b16 %v371
    %v436 = vunpack.c.h.b16 %v371
    %v437 = vunpack.c.l.b16 %v372
    %v438 = vunpack.c.h.b16 %v372
    %v439 = vunpack.c.l.b16 %v373
    %v440 = vunpack.c.h.b16 %v373
    %v441 = vunpack.c.l.b16 %v374
    %v442 = vunpack.c.h.b16 %v374
    %v443 = vunpack.c.l.b16 %v375
    %v444 = vunpack.c.h.b16 %v375
    %v445 = vunpack.c.l.b16 %v376
    %v446 = vunpack.c.h.b16 %v376
    %v447 = vunpack.c.l.b16 %v377
    %v448 = vunpack.c.h.b16 %v377
    %v449 = vunpack.c.l.b16 %v378
    %v450 = vunpack.c.h.b16 %v378
    %v451 = vunpack.c.l.b16 %v379
    %v452 = vunpack.c.h.b16 %v379
    %v453 = vunpack.c.l.b16 %v380
    %v454 = vunpack.c.h.b16 %v380
    %v455 = vunpack.c.l.b16 %v381
    %v456 = vunpack.c.h.b16 %v381
    %v457 = vunpack.c.l.b16 %v382
    %v458 = vunpack.c.h.b16 %v382
    %v459 = vunpack.c.l.b16 %v383
    %v460 = vunpack.c.h.b16 %v383
    %v461 = vunpack.c.l.b16 %v384
    %v462 = vunpack.c.h.b16 %v384
    %v463 = vunpack.c.l.b16 %v385
    %v464 = vunpack.c.h.b16 %v385
    %v465 = vunpack.c.l.b16 %v386
    %v466 = vunpack.c.h.b16 %v386
    %v467 = vunpack.c.l.b16 %v387
    %v468 = vunpack.c.h.b16 %v387
    %v469 = vunpack.c.l.b16 %v388
    %v470 = vunpack.c.h.b16 %v388
    %v471 = vunpack.c.l.b16 %v389
    %v472 = vunpack.c.h.b16 %v389
    %v473 = vunpack.c.l.b16 %v390
    %v474 = vunpack.c.h.b16 %v390
    %v475 = vunpack.c.l.b16 %v391
    %v476 = vunpack.c.h.b16 %v391
    %v477 = vunpack.c.l.b16 %v392
    %v478 = vunpack.c.h.b16 %v392
    %v479 = vunpack.c.l.b16 %v393
    %v480 = vunpack.c.h.b16 %v393
    %v481 = vunpack.c.l.b16 %v394
    %v482 = vunpack.c.h.b16 %v394
    %v483 = vunpack.c.l.b16 %v395
    %v484 = vunpack.c.h.b16 %v395
    %v485 = vunpack.c.l.b16 %v396
    %v486 = vunpack.c.h.b16 %v396
    %v487 = vunpack.c.l.b16 %v397
    %v488 = vunpack.c.h.b16 %v397
    %v489 = vunpack.c.l.b16 %v398
    %v490 = vunpack.c.h.b16 %v398
    %v491 = vunpack.c.l.b16 %v399
    %v492 = vunpack.c.h.b16 %v399
    %v493 = vunpack.c.l.b16 %v400
    %v494 = vunpack.c.h.b16 %v400
    %v495 = vunpack.c.l.b16 %v401
    %v496 = vunpack.c.h.b16 %v401
    %v497 = vunpack.c.l.b16 %v402
    %v498 = vunpack.c.h.b16 %v402
    %v499 = vpack.c.b16 %v439, %v435
    %v500 = vpack.c.b16 %v440, %v436
    %v501 = vpack.c.b16 %v441, %v437
    %v502 = vpack.c.b16 %v442, %v438
    %v503 = vpack.c.b16 %v447, %v443
    %v504 = vpack.c.b16 %v448, %v444
    %v505 = vpack.c.b16 %v449, %v445
    %v506 = vpack.c.b16 %v450, %v446
    %v507 = vpack.c.b16 %v455, %v451
    %v508 = vpack.c.b16 %v456, %v452
    %v509 = vpack.c.b16 %v457, %v453
    %v510 = vpack.c.b16 %v458, %v454
    %v511 = vpack.c.b16 %v463, %v459
    %v512 = vpack.c.b16 %v464, %v460
    %v513 = vpack.c.b16 %v465, %v461
    %v514 = vpack.c.b16 %v466, %v462
    %v515 = vpack.c.b16 %v471, %v467
    %v516 = vpack.c.b16 %v472, %v468
    %v517 = vpack.c.b16 %v473, %v469
    %v518 = vpack.c.b16 %v474, %v470
    %v519 = vpack.c.b16 %v479, %v475
    %v520 = vpack.c.b16 %v480, %v476
    %v521 = vpack.c.b16 %v481, %v477
    %v522 = vpack.c.b16 %v482, %v478
    %v523 = vpack.c.b16 %v487, %v483
    %v524 = vpack.c.b16 %v488, %v484
    %v525 = vpack.c.b16 %v489, %v485
    %v526 = vpack.c.b16 %v490, %v486
    %v527 = vpack.c.b16 %v495, %v491
    %v528 = vpack.c.b16 %v496, %v492
    %v529 = vpack.c.b16 %v497, %v493
    %v530 = vpack.c.b16 %v498, %v494
    %563 = vmatprep.subr.bf16.mxu0 %v500
    %564 = vmatpush1.bf16.msra.mxu0 %v499
    %565 = vmatprep.subr.bf16.mxu0 %v504
    %566 = vmatpush1.bf16.msra.mxu0 %v503
    %567 = vmatprep.subr.bf16.mxu0 %v508
    %568 = vmatpush1.bf16.msra.mxu0 %v507
    %569 = vmatprep.subr.bf16.mxu0 %v512
    %570 = vmatpush1.bf16.msra.mxu0 %v511
    %571 = vmatprep.subr.bf16.mxu0 %v516
    %572 = vmatpush1.bf16.msra.mxu0 %v515
    %573 = vmatprep.subr.bf16.mxu0 %v520
    %574 = vmatpush1.bf16.msra.mxu0 %v519
    %575 = vmatprep.subr.bf16.mxu0 %v524
    %576 = vmatpush1.bf16.msra.mxu0 %v523
    %577 = vmatprep.subr.bf16.mxu0 %v528
    %578 = vmatpush1.bf16.msra.mxu0 %v527
    %579 = vmatprep.subr.bf16.mxu0 0
    %580 = vmatpush1.bf16.msra.mxu0 0
    %581 = vmatprep.subr.bf16.mxu0 0
    %582 = vmatpush1.bf16.msra.mxu0 0
    %583 = vmatprep.subr.bf16.mxu0 0
    %584 = vmatpush1.bf16.msra.mxu0 0
    %585 = vmatprep.subr.bf16.mxu0 0
    %586 = vmatpush1.bf16.msra.mxu0 0
    %587 = vmatprep.subr.bf16.mxu0 0
    %588 = vmatpush1.bf16.msra.mxu0 0
    %589 = vmatprep.subr.bf16.mxu0 0
    %590 = vmatpush1.bf16.msra.mxu0 0
    %591 = vmatprep.subr.bf16.mxu0 0
    %592 = vmatpush1.bf16.msra.mxu0 0
    %593 = vmatprep.subr.bf16.mxu0 0
    %594 = vmatpush1.bf16.msra.mxu0 0
    %595 = vmatprep.mubr.bf16.mxu0 0
    %596 = vmatmul.mubr.bf16.gmra.mrb[0].mxu0 %v92
    %v597 = vpop.f32.mrb[0].mxu0
    %v598 = vadd.f32 0.0, %v597
    %v599 = vpop.f32.mrb[0].mxu0
    %v600 = vadd.f32 0.0, %v599
    %v601 = vpop.f32.mrb[0].mxu0
    %v602 = vadd.f32 0.0, %v601
    %v603 = vpop.f32.mrb[0].mxu0
    %v604 = vadd.f32 0.0, %v603
    %605 = vdwg.mxu0
    %606 = vmatprep.subr.bf16.mxu0 %v502
    %607 = vmatpush1.bf16.msra.mxu0 %v501
    %608 = vmatprep.subr.bf16.mxu0 %v506
    %609 = vmatpush1.bf16.msra.mxu0 %v505
    %610 = vmatprep.subr.bf16.mxu0 %v510
    %611 = vmatpush1.bf16.msra.mxu0 %v509
    %612 = vmatprep.subr.bf16.mxu0 %v514
    %613 = vmatpush1.bf16.msra.mxu0 %v513
    %614 = vmatprep.subr.bf16.mxu0 %v518
    %615 = vmatpush1.bf16.msra.mxu0 %v517
    %616 = vmatprep.subr.bf16.mxu0 %v522
    %617 = vmatpush1.bf16.msra.mxu0 %v521
    %618 = vmatprep.subr.bf16.mxu0 %v526
    %619 = vmatpush1.bf16.msra.mxu0 %v525
    %620 = vmatprep.subr.bf16.mxu0 %v530
    %621 = vmatpush1.bf16.msra.mxu0 %v529
    %622 = vmatprep.subr.bf16.mxu0 0
    %623 = vmatpush1.bf16.msra.mxu0 0
    %624 = vmatprep.subr.bf16.mxu0 0
    %625 = vmatpush1.bf16.msra.mxu0 0
    %626 = vmatprep.subr.bf16.mxu0 0
    %627 = vmatpush1.bf16.msra.mxu0 0
    %628 = vmatprep.subr.bf16.mxu0 0
    %629 = vmatpush1.bf16.msra.mxu0 0
    %630 = vmatprep.subr.bf16.mxu0 0
    %631 = vmatpush1.bf16.msra.mxu0 0
    %632 = vmatprep.subr.bf16.mxu0 0
    %633 = vmatpush1.bf16.msra.mxu0 0
    %634 = vmatprep.subr.bf16.mxu0 0
    %635 = vmatpush1.bf16.msra.mxu0 0
    %636 = vmatprep.subr.bf16.mxu0 0
    %637 = vmatpush1.bf16.msra.mxu0 0
    %638 = vmatprep.mubr.bf16.mxu0 0
    %639 = vmatmul.mubr.bf16.gmra.mrb[0].mxu0 %v92
    %v640 = vpop.f32.mrb[0].mxu0
    %v641 = vadd.f32 0.0, %v640
    %v642 = vpop.f32.mrb[0].mxu0
    %v643 = vadd.f32 0.0, %v642
    %v644 = vpop.f32.mrb[0].mxu0
    %v645 = vadd.f32 0.0, %v644
    %v646 = vpop.f32.mrb[0].mxu0
    %v647 = vadd.f32 0.0, %v646
    %648 = vdwg.mxu0
    %v649 = vxor.u32 %v320, 2147483648
    %v650 = vxor.u32 %v322, 2147483648
    %v651 = vxor.u32 %v363, 2147483648
    %v652 = vxor.u32 %v365, 2147483648
    %v653 = vxor.u32 %v324, 2147483648
    %v654 = vxor.u32 %v326, 2147483648
    %v655 = vxor.u32 %v367, 2147483648
    %v656 = vxor.u32 %v369, 2147483648
    %v657 = vmul.f32 %v649, 1.442695
    %v658 = vpow.pop %v657
    %v659 = vmul.f32 %v650, 1.442695
    %v660 = vpow.pop %v659
    %v661 = vmul.f32 %v651, 1.442695
    %v662 = vpow.pop %v661
    %v663 = vmul.f32 %v652, 1.442695
    %v664 = vpow.pop %v663
    %v665 = vmul.f32 %v653, 1.442695
    %v666 = vpow.pop %v665
    %v667 = vmul.f32 %v654, 1.442695
    %v668 = vpow.pop %v667
    %v669 = vmul.f32 %v655, 1.442695
    %v670 = vpow.pop %v669
    %v671 = vmul.f32 %v656, 1.442695
    %v672 = vpow.pop %v671
    %v673 = vadd.f32 %v658, 1.0
    %v674 = vadd.f32 %v660, 1.0
    %v675 = vadd.f32 %v662, 1.0
    %v676 = vadd.f32 %v664, 1.0
    %v677 = vadd.f32 %v666, 1.0
    %v678 = vadd.f32 %v668, 1.0
    %v679 = vadd.f32 %v670, 1.0
    %v680 = vadd.f32 %v672, 1.0
    %v681 = vrcp.pop %v673
    %v682 = vmul.f32 1.0, %v681
    %v683 = vrcp.pop %v674
    %v684 = vmul.f32 1.0, %v683
    %v685 = vrcp.pop %v675
    %v686 = vmul.f32 1.0, %v685
    %v687 = vrcp.pop %v676
    %v688 = vmul.f32 1.0, %v687
    %v689 = vrcp.pop %v677
    %v690 = vmul.f32 1.0, %v689
    %v691 = vrcp.pop %v678
    %v692 = vmul.f32 1.0, %v691
    %v693 = vrcp.pop %v679
    %v694 = vmul.f32 1.0, %v693
    %v695 = vrcp.pop %v680
    %v696 = vmul.f32 1.0, %v695
    %v697 = vmul.f32 %v320, %v682
    %v698 = vmul.f32 %v322, %v684
    %v699 = vmul.f32 %v363, %v686
    %v700 = vmul.f32 %v365, %v688
    %v701 = vmul.f32 %v324, %v690
    %v702 = vmul.f32 %v326, %v692
    %v703 = vmul.f32 %v367, %v694
    %v704 = vmul.f32 %v369, %v696
    %v705 = vxor.u32 %v598, 2147483648
    %v706 = vxor.u32 %v600, 2147483648
    %v707 = vxor.u32 %v641, 2147483648
    %v708 = vxor.u32 %v643, 2147483648
    %v709 = vxor.u32 %v602, 2147483648
    %v710 = vxor.u32 %v604, 2147483648
    %v711 = vxor.u32 %v645, 2147483648
    %v712 = vxor.u32 %v647, 2147483648
    %v713 = vmul.f32 %v705, 1.442695
    %v714 = vpow.pop %v713
    %v715 = vmul.f32 %v706, 1.442695
    %v716 = vpow.pop %v715
    %v717 = vmul.f32 %v707, 1.442695
    %v718 = vpow.pop %v717
    %v719 = vmul.f32 %v708, 1.442695
    %v720 = vpow.pop %v719
    %v721 = vmul.f32 %v709, 1.442695
    %v722 = vpow.pop %v721
    %v723 = vmul.f32 %v710, 1.442695
    %v724 = vpow.pop %v723
    %v725 = vmul.f32 %v711, 1.442695
    %v726 = vpow.pop %v725
    %v727 = vmul.f32 %v712, 1.442695
    %v728 = vpow.pop %v727
    %v729 = vadd.f32 %v714, 1.0
    %v730 = vadd.f32 %v716, 1.0
    %v731 = vadd.f32 %v718, 1.0
    %v732 = vadd.f32 %v720, 1.0
    %v733 = vadd.f32 %v722, 1.0
    %v734 = vadd.f32 %v724, 1.0
    %v735 = vadd.f32 %v726, 1.0
    %v736 = vadd.f32 %v728, 1.0
    %v737 = vrcp.pop %v729
    %v738 = vmul.f32 1.0, %v737
    %v739 = vrcp.pop %v730
    %v740 = vmul.f32 1.0, %v739
    %v741 = vrcp.pop %v731
    %v742 = vmul.f32 1.0, %v741
    %v743 = vrcp.pop %v732
    %v744 = vmul.f32 1.0, %v743
    %v745 = vrcp.pop %v733
    %v746 = vmul.f32 1.0, %v745
    %v747 = vrcp.pop %v734
    %v748 = vmul.f32 1.0, %v747
    %v749 = vrcp.pop %v735
    %v750 = vmul.f32 1.0, %v749
    %v751 = vrcp.pop %v736
    %v752 = vmul.f32 1.0, %v751
    %v753 = vmul.f32 %v598, %v738
    %v754 = vmul.f32 %v600, %v740
    %v755 = vmul.f32 %v641, %v742
    %v756 = vmul.f32 %v643, %v744
    %v757 = vmul.f32 %v602, %v746
    %v758 = vmul.f32 %v604, %v748
    %v759 = vmul.f32 %v645, %v750
    %v760 = vmul.f32 %v647, %v752
    %v761 = vmul.f32 %v697, %v753
    %v762 = vmul.f32 %v698, %v754
    %v763 = vmul.f32 %v699, %v755
    %v764 = vmul.f32 %v700, %v756
    %v765 = vmul.f32 %v701, %v757
    %v766 = vmul.f32 %v702, %v758
    %v767 = vmul.f32 %v703, %v759
    %v768 = vmul.f32 %v704, %v760
    %v769 = vld [vmem:[#allocation2] sm:$0xff]
    %v770 = vld [vmem:[#allocation2 + $0x8] sm:$0xff]
    %v771 = vpack.c.bf16 %v765, %v761
    %v772 = vpack.c.bf16 %v766, %v762
    %v773 = vpack.c.bf16 %v767, %v763
    %v774 = vpack.c.bf16 %v768, %v764
    %v775 = vld [vmem:[#allocation9] sm:$0xf]
    %v776 = vld [vmem:[#allocation9 + $0x4] sm:$0xf]
    %v777 = vld [vmem:[#allocation9 + $0x8] sm:$0xf]
    %v778 = vld [vmem:[#allocation9 + $0xc] sm:$0xf]
    %v779 = vld [vmem:[#allocation9 + $0x10] sm:$0xf]
    %v780 = vld [vmem:[#allocation9 + $0x14] sm:$0xf]
    %v781 = vld [vmem:[#allocation9 + $0x18] sm:$0xf]
    %v782 = vld [vmem:[#allocation9 + $0x1c] sm:$0xf]
    %v783 = vld [vmem:[#allocation9 + $0x20] sm:$0xf]
    %v784 = vld [vmem:[#allocation9 + $0x24] sm:$0xf]
    %v785 = vld [vmem:[#allocation9 + $0x28] sm:$0xf]
    %v786 = vld [vmem:[#allocation9 + $0x2c] sm:$0xf]
    %v787 = vld [vmem:[#allocation9 + $0x30] sm:$0xf]
    %v788 = vld [vmem:[#allocation9 + $0x34] sm:$0xf]
    %v789 = vld [vmem:[#allocation9 + $0x38] sm:$0xf]
    %v790 = vld [vmem:[#allocation9 + $0x3c] sm:$0xf]
    %v791 = vld [vmem:[#allocation9 + $0x40] sm:$0xf]
    %v792 = vld [vmem:[#allocation9 + $0x44] sm:$0xf]
    %v793 = vld [vmem:[#allocation9 + $0x48] sm:$0xf]
    %v794 = vld [vmem:[#allocation9 + $0x4c] sm:$0xf]
    %v795 = vld [vmem:[#allocation9 + $0x50] sm:$0xf]
    %v796 = vld [vmem:[#allocation9 + $0x54] sm:$0xf]
    %v797 = vld [vmem:[#allocation9 + $0x58] sm:$0xf]
    %v798 = vld [vmem:[#allocation9 + $0x5c] sm:$0xf]
    %v799 = vld [vmem:[#allocation9 + $0x60] sm:$0xf]
    %v800 = vld [vmem:[#allocation9 + $0x64] sm:$0xf]
    %v801 = vld [vmem:[#allocation9 + $0x68] sm:$0xf]
    %v802 = vld [vmem:[#allocation9 + $0x6c] sm:$0xf]
    %v803 = vld [vmem:[#allocation9 + $0x70] sm:$0xf]
    %v804 = vld [vmem:[#allocation9 + $0x74] sm:$0xf]
    %v805 = vld [vmem:[#allocation9 + $0x78] sm:$0xf]
    %v806 = vld [vmem:[#allocation9 + $0x7c] sm:$0xf]
    %v807 = vld [vmem:[#allocation9 + $0x80] sm:$0xf]
    %v808 = vld [vmem:[#allocation9 + $0x84] sm:$0xf]
    %v809 = vld [vmem:[#allocation9 + $0x88] sm:$0xf]
    %v810 = vld [vmem:[#allocation9 + $0x8c] sm:$0xf]
    %v811 = vld [vmem:[#allocation9 + $0x90] sm:$0xf]
    %v812 = vld [vmem:[#allocation9 + $0x94] sm:$0xf]
    %v813 = vld [vmem:[#allocation9 + $0x98] sm:$0xf]
    %v814 = vld [vmem:[#allocation9 + $0x9c] sm:$0xf]
    %v815 = vld [vmem:[#allocation9 + $0xa0] sm:$0xf]
    %v816 = vld [vmem:[#allocation9 + $0xa4] sm:$0xf]
    %v817 = vld [vmem:[#allocation9 + $0xa8] sm:$0xf]
    %v818 = vld [vmem:[#allocation9 + $0xac] sm:$0xf]
    %v819 = vld [vmem:[#allocation9 + $0xb0] sm:$0xf]
    %v820 = vld [vmem:[#allocation9 + $0xb4] sm:$0xf]
    %v821 = vld [vmem:[#allocation9 + $0xb8] sm:$0xf]
    %v822 = vld [vmem:[#allocation9 + $0xbc] sm:$0xf]
    %v823 = vld [vmem:[#allocation9 + $0xc0] sm:$0xf]
    %v824 = vld [vmem:[#allocation9 + $0xc4] sm:$0xf]
    %v825 = vld [vmem:[#allocation9 + $0xc8] sm:$0xf]
    %v826 = vld [vmem:[#allocation9 + $0xcc] sm:$0xf]
    %v827 = vld [vmem:[#allocation9 + $0xd0] sm:$0xf]
    %v828 = vld [vmem:[#allocation9 + $0xd4] sm:$0xf]
    %v829 = vld [vmem:[#allocation9 + $0xd8] sm:$0xf]
    %v830 = vld [vmem:[#allocation9 + $0xdc] sm:$0xf]
    %v831 = vld [vmem:[#allocation9 + $0xe0] sm:$0xf]
    %v832 = vld [vmem:[#allocation9 + $0xe4] sm:$0xf]
    %v833 = vld [vmem:[#allocation9 + $0xe8] sm:$0xf]
    %v834 = vld [vmem:[#allocation9 + $0xec] sm:$0xf]
    %v835 = vld [vmem:[#allocation9 + $0xf0] sm:$0xf]
    %v836 = vld [vmem:[#allocation9 + $0xf4] sm:$0xf]
    %v837 = vld [vmem:[#allocation9 + $0xf8] sm:$0xf]
    %v838 = vld [vmem:[#allocation9 + $0xfc] sm:$0xf]
    %v903 = vunpack.c.l.b16 %v775
    %v904 = vunpack.c.l.b16 %v776
    %v905 = vunpack.c.l.b16 %v777
    %v906 = vunpack.c.l.b16 %v778
    %v907 = vunpack.c.l.b16 %v779
    %v908 = vunpack.c.l.b16 %v780
    %v909 = vunpack.c.l.b16 %v781
    %v910 = vunpack.c.l.b16 %v782
    %v911 = vunpack.c.l.b16 %v783
    %v912 = vunpack.c.l.b16 %v784
    %v913 = vunpack.c.l.b16 %v785
    %v914 = vunpack.c.l.b16 %v786
    %v915 = vunpack.c.l.b16 %v787
    %v916 = vunpack.c.l.b16 %v788
    %v917 = vunpack.c.l.b16 %v789
    %v918 = vunpack.c.l.b16 %v790
    %v919 = vunpack.c.l.b16 %v791
    %v920 = vunpack.c.l.b16 %v792
    %v921 = vunpack.c.l.b16 %v793
    %v922 = vunpack.c.l.b16 %v794
    %v923 = vunpack.c.l.b16 %v795
    %v924 = vunpack.c.l.b16 %v796
    %v925 = vunpack.c.l.b16 %v797
    %v926 = vunpack.c.l.b16 %v798
    %v927 = vunpack.c.l.b16 %v799
    %v928 = vunpack.c.l.b16 %v800
    %v929 = vunpack.c.l.b16 %v801
    %v930 = vunpack.c.l.b16 %v802
    %v931 = vunpack.c.l.b16 %v803
    %v932 = vunpack.c.l.b16 %v804
    %v933 = vunpack.c.l.b16 %v805
    %v934 = vunpack.c.l.b16 %v806
    %v935 = vunpack.c.l.b16 %v807
    %v936 = vunpack.c.l.b16 %v808
    %v937 = vunpack.c.l.b16 %v809
    %v938 = vunpack.c.l.b16 %v810
    %v939 = vunpack.c.l.b16 %v811
    %v940 = vunpack.c.l.b16 %v812
    %v941 = vunpack.c.l.b16 %v813
    %v942 = vunpack.c.l.b16 %v814
    %v943 = vunpack.c.l.b16 %v815
    %v944 = vunpack.c.l.b16 %v816
    %v945 = vunpack.c.l.b16 %v817
    %v946 = vunpack.c.l.b16 %v818
    %v947 = vunpack.c.l.b16 %v819
    %v948 = vunpack.c.l.b16 %v820
    %v949 = vunpack.c.l.b16 %v821
    %v950 = vunpack.c.l.b16 %v822
    %v951 = vunpack.c.l.b16 %v823
    %v952 = vunpack.c.l.b16 %v824
    %v953 = vunpack.c.l.b16 %v825
    %v954 = vunpack.c.l.b16 %v826
    %v955 = vunpack.c.l.b16 %v827
    %v956 = vunpack.c.l.b16 %v828
    %v957 = vunpack.c.l.b16 %v829
    %v958 = vunpack.c.l.b16 %v830
    %v959 = vunpack.c.l.b16 %v831
    %v960 = vunpack.c.l.b16 %v832
    %v961 = vunpack.c.l.b16 %v833
    %v962 = vunpack.c.l.b16 %v834
    %v963 = vunpack.c.l.b16 %v835
    %v964 = vunpack.c.l.b16 %v836
    %v965 = vunpack.c.l.b16 %v837
    %v966 = vunpack.c.l.b16 %v838
    %v967 = vpack.c.b16 %v904, %v903
    %v968 = vpack.c.b16 %v906, %v905
    %v969 = vpack.c.b16 %v908, %v907
    %v970 = vpack.c.b16 %v910, %v909
    %v971 = vpack.c.b16 %v912, %v911
    %v972 = vpack.c.b16 %v914, %v913
    %v973 = vpack.c.b16 %v916, %v915
    %v974 = vpack.c.b16 %v918, %v917
    %v975 = vpack.c.b16 %v920, %v919
    %v976 = vpack.c.b16 %v922, %v921
    %v977 = vpack.c.b16 %v924, %v923
    %v978 = vpack.c.b16 %v926, %v925
    %v979 = vpack.c.b16 %v928, %v927
    %v980 = vpack.c.b16 %v930, %v929
    %v981 = vpack.c.b16 %v932, %v931
    %v982 = vpack.c.b16 %v934, %v933
    %v983 = vpack.c.b16 %v936, %v935
    %v984 = vpack.c.b16 %v938, %v937
    %v985 = vpack.c.b16 %v940, %v939
    %v986 = vpack.c.b16 %v942, %v941
    %v987 = vpack.c.b16 %v944, %v943
    %v988 = vpack.c.b16 %v946, %v945
    %v989 = vpack.c.b16 %v948, %v947
    %v990 = vpack.c.b16 %v950, %v949
    %v991 = vpack.c.b16 %v952, %v951
    %v992 = vpack.c.b16 %v954, %v953
    %v993 = vpack.c.b16 %v956, %v955
    %v994 = vpack.c.b16 %v958, %v957
    %v995 = vpack.c.b16 %v960, %v959
    %v996 = vpack.c.b16 %v962, %v961
    %v997 = vpack.c.b16 %v964, %v963
    %v998 = vpack.c.b16 %v966, %v965
    %1031 = vmatprep.subr.bf16.mxu0 0
    %1032 = vmatpush1.bf16.msra.mxu0 %v967
    %1033 = vmatprep.subr.bf16.mxu0 0
    %1034 = vmatpush1.bf16.msra.mxu0 %v968
    %1035 = vmatprep.subr.bf16.mxu0 0
    %1036 = vmatpush1.bf16.msra.mxu0 %v969
    %1037 = vmatprep.subr.bf16.mxu0 0
    %1038 = vmatpush1.bf16.msra.mxu0 %v970
    %1039 = vmatprep.subr.bf16.mxu0 0
    %1040 = vmatpush1.bf16.msra.mxu0 %v971
    %1041 = vmatprep.subr.bf16.mxu0 0
    %1042 = vmatpush1.bf16.msra.mxu0 %v972
    %1043 = vmatprep.subr.bf16.mxu0 0
    %1044 = vmatpush1.bf16.msra.mxu0 %v973
    %1045 = vmatprep.subr.bf16.mxu0 0
    %1046 = vmatpush1.bf16.msra.mxu0 %v974
    %1047 = vmatprep.subr.bf16.mxu0 0
    %1048 = vmatpush1.bf16.msra.mxu0 %v975
    %1049 = vmatprep.subr.bf16.mxu0 0
    %1050 = vmatpush1.bf16.msra.mxu0 %v976
    %1051 = vmatprep.subr.bf16.mxu0 0
    %1052 = vmatpush1.bf16.msra.mxu0 %v977
    %1053 = vmatprep.subr.bf16.mxu0 0
    %1054 = vmatpush1.bf16.msra.mxu0 %v978
    %1055 = vmatprep.subr.bf16.mxu0 0
    %1056 = vmatpush1.bf16.msra.mxu0 %v979
    %1057 = vmatprep.subr.bf16.mxu0 0
    %1058 = vmatpush1.bf16.msra.mxu0 %v980
    %1059 = vmatprep.subr.bf16.mxu0 0
    %1060 = vmatpush1.bf16.msra.mxu0 %v981
    %1061 = vmatprep.subr.bf16.mxu0 0
    %1062 = vmatpush1.bf16.msra.mxu0 %v982
    %1063 = vmatprep.mubr.bf16.mxu0 %v772
    %1064 = vmatmul.mubr.bf16.gmra.mrb[0].mxu0 %v771
    %v1065 = vpop.f32.mrb[0].mxu0
    %v1066 = vadd.f32 0.0, %v1065
    %v1067 = vpop.f32.mrb[0].mxu0
    %v1068 = vpop.f32.mrb[0].mxu0
    %v1069 = vadd.f32 0.0, %v1068
    %v1070 = vpop.f32.mrb[0].mxu0
    %1071 = vdwg.mxu0
    %1072 = vmatprep.subr.bf16.mxu0 0
    %1073 = vmatpush1.bf16.msra.mxu0 %v983
    %1074 = vmatprep.subr.bf16.mxu0 0
    %1075 = vmatpush1.bf16.msra.mxu0 %v984
    %1076 = vmatprep.subr.bf16.mxu0 0
    %1077 = vmatpush1.bf16.msra.mxu0 %v985
    %1078 = vmatprep.subr.bf16.mxu0 0
    %1079 = vmatpush1.bf16.msra.mxu0 %v986
    %1080 = vmatprep.subr.bf16.mxu0 0
    %1081 = vmatpush1.bf16.msra.mxu0 %v987
    %1082 = vmatprep.subr.bf16.mxu0 0
    %1083 = vmatpush1.bf16.msra.mxu0 %v988
    %1084 = vmatprep.subr.bf16.mxu0 0
    %1085 = vmatpush1.bf16.msra.mxu0 %v989
    %1086 = vmatprep.subr.bf16.mxu0 0
    %1087 = vmatpush1.bf16.msra.mxu0 %v990
    %1088 = vmatprep.subr.bf16.mxu0 0
    %1089 = vmatpush1.bf16.msra.mxu0 %v991
    %1090 = vmatprep.subr.bf16.mxu0 0
    %1091 = vmatpush1.bf16.msra.mxu0 %v992
    %1092 = vmatprep.subr.bf16.mxu0 0
    %1093 = vmatpush1.bf16.msra.mxu0 %v993
    %1094 = vmatprep.subr.bf16.mxu0 0
    %1095 = vmatpush1.bf16.msra.mxu0 %v994
    %1096 = vmatprep.subr.bf16.mxu0 0
    %1097 = vmatpush1.bf16.msra.mxu0 %v995
    %1098 = vmatprep.subr.bf16.mxu0 0
    %1099 = vmatpush1.bf16.msra.mxu0 %v996
    %1100 = vmatprep.subr.bf16.mxu0 0
    %1101 = vmatpush1.bf16.msra.mxu0 %v997
    %1102 = vmatprep.subr.bf16.mxu0 0
    %1103 = vmatpush1.bf16.msra.mxu0 %v998
    %1104 = vmatprep.mubr.bf16.mxu0 %v774
    %1105 = vmatmul.mubr.bf16.gmra.mrb[0].mxu0 %v773
    %v1106 = vpop.f32.mrb[0].mxu0
    %v1107 = vadd.f32 %v1066, %v1106
    %v1108 = vpop.f32.mrb[0].mxu0
    %v1109 = vpop.f32.mrb[0].mxu0
    %v1110 = vadd.f32 %v1069, %v1109
    %v1111 = vpop.f32.mrb[0].mxu0
    %1112 = vdwg.mxu0
    %v1113 = vadd.f32 %v769, %v1107
    %v1114 = vadd.f32 %v770, %v1110
    %1115 = vst [vmem:[#allocation2] sm:$0xff] %v1113
    %1116 = vst [vmem:[#allocation2 + $0x8] sm:$0xff] %v1114
    // Predicated region
    $region42: #{mlp_pallas.1} parent=1 // pred_check
      %p1117 = pneg %p77
    $region43: #{mlp_pallas.1} parent=1 // pred_check_branch
      %1119 = sbr.rel (%p1117) target = $region45
    $region44: #{mlp_pallas.1} parent=1 // pred_region
      %v1120 = vld [vmem:[#allocation2] sm:$0xff]
      %v1121 = vld [vmem:[#allocation2 + $0x8] sm:$0xff]
      %1122 = vst [vmem:[#allocation11] sm:$0xff] %v1120
      %1123 = vst [vmem:[#allocation11 + $0x8] sm:$0xff] %v1121
    $region45: #{mlp_pallas.1} parent=1 // pred_fallthru
      _
    // Predicated region
    $region46: #{mlp_pallas.1} parent=1 // pred_check
      _
    $region47: #{mlp_pallas.1} parent=1 // pred_check_branch
      %1125 = sbr.rel (0) target = $region49
    $region48: #{mlp_pallas.1} parent=1 // pred_region
      %s1127 = ssub.s32 256, 256
      %1128 = vsyncadd [#allocation5], %s1127
      %s1129 = sshll.u32 [#allocation11], 4
      %s1130 = int_to_ptr.vmem [resolvable:$true] %s1129
      %1135 = dma.vmem_to_hbm [thread:$0]  %s1130, 256, %s5, [#allocation5], 128, 128, 8
    $region49: #{mlp_pallas.1} parent=1 // pred_fallthru
      _
    // Predicated region
    $region50: #{mlp_pallas.1} parent=1 // pred_check
      _
    $region51: #{mlp_pallas.1} parent=1 // pred_check_branch
      %1137 = sbr.rel (0) target = $region53
    $region52: #{mlp_pallas.1} parent=1 // pred_region
      %1138 = dma.done [#allocation5], 256
    $region53: #{mlp_pallas.1} parent=1 // pred_fallthru
      _
    %1139 = vsyncpa [#allocation4], 1
    %1140 = vsyncpa [#allocation7], 1
    %1141 = vsyncpa [#allocation10], 1
    %1142 = vsyncpa [#allocation5], 1

</llo_original>
